<compile_context>
chip_gen: v7x
topology: tpu7x:2x2x1
jax: 0.10.0
libtpu: 0.0.40
codegen_flags: <defaults>
</compile_context>

<pallas_src>
import functools

import jax
import jax.numpy as jnp
import numpy as np
from jax.experimental import pallas as pl
from jax.experimental.pallas import tpu as pltpu


def _round_up(x, m):
    return ((x + m - 1) // m) * m


# ------------------------------- Pallas kernel -------------------------------
def _fused_conv_relu_pool_fc_kernel(p_ref, wc_ref, wf_ref, b_ref, o_ref):
    # p_ref : (1, HW, Kpad)  im2col patches of ONE image (lane-dense K)
    # wc_ref: (Kpad, Cout)   fused 3x3 conv weights (zero-padded rows)
    # wf_ref: (Cout, Npad)   FC weights, pre-scaled by 1/(H*W), zero-padded cols
    # b_ref : (1, Npad)      FC bias (zero-padded cols)
    # o_ref : (1, 1, Npad)   logits row for this image (lane-dense store)
    y = jnp.dot(p_ref[0], wc_ref[...],
                preferred_element_type=jnp.float32)            # conv = 1 matmul
    y = jnp.maximum(y, 0.0)                                    # ReLU (f32 VPU)
    pooled = jnp.sum(y, axis=0, keepdims=True)                 # sum pool (1,Cout)
    o_ref[0] = (jnp.dot(pooled, wf_ref[...],                   # fused FC + bias
                        preferred_element_type=jnp.float32)
                + b_ref[...])


# --------------------------- one-time weight prep ----------------------------
def prepare_params(params, H, W):
    """Hoisted out of the per-step forward: run ONCE per set of weights."""
    Cout, Cin, _, _ = params["w_conv"].shape
    Nclass = params["w_fc"].shape[0]
    K = 9 * Cin
    K_pad = _round_up(K, 128)           # lane-align the contraction axis
    N_pad = _round_up(Nclass, 128)      # lane-align the class/output axis

    # OIHW -> HWIO -> (9*Cin, Cout); row order (kh, kw, cin) matches patches.
    w_conv2d = jnp.transpose(params["w_conv"], (2, 3, 1, 0)).reshape(K, Cout)
    w_conv2d = jnp.pad(w_conv2d, ((0, K_pad - K), (0, 0)))

    # Fold the 1/(H*W) average-pool scale into the FC weights (pool -> sum).
    w_fc_t = jnp.transpose(params["w_fc"]) / float(H * W)      # (Cout, Nclass)
    w_fc_t = jnp.pad(w_fc_t, ((0, 0), (0, N_pad - Nclass)))
    b_row = jnp.pad(params["b_fc"].reshape(1, Nclass),
                    ((0, 0), (0, N_pad - Nclass)))

    return {"w_conv": w_conv2d, "w_fc": w_fc_t, "b_fc": b_row}


# --------------------------------- forward -----------------------------------
def combined_model_forward(x_nchw, prepped, *, nclass):
    """Fused forward: conv3x3(SAME, no bias) -> ReLU -> GAP -> Linear."""
    B, Cin, H, W = x_nchw.shape
    HW = H * W
    K = 9 * Cin
    K_pad, Cout = prepped["w_conv"].shape
    N_pad = prepped["w_fc"].shape[1]

    # ---- layout plumbing (all fused under jit) ------------------------------
    # NCHW -> NHWC, 1-pixel SAME pad, im2col -> (B, HW, Kpad) lane-dense patches.
    # TODO(synk): at real ResNet-50 scale, don't materialize the 9x im2col in
    # HBM: pass the padded NHWC activation once and build the taps per M-tile
    # inside the kernel (shifted pl.ds reads on a halo'd row strip); also cast
    # patches/weights to bf16 for the v6e/v7x MXU (needs a relaxed tolerance)
    # and give the grid-invariant weight/bias specs pipeline_mode=pl.Buffered(1)
    # when tiling M, sizing tiles for v7x's 64 MiB VMEM.
    x_nhwc = jnp.transpose(x_nchw, (0, 2, 3, 1))
    x_pad = jnp.pad(x_nhwc, ((0, 0), (1, 1), (1, 1), (0, 0)))
    taps = [x_pad[:, kh:kh + H, kw:kw + W, :]
            for kh in range(3) for kw in range(3)]
    patches = jnp.concatenate(taps, axis=-1).reshape(B, HW, K)
    patches = jnp.pad(patches, ((0, 0), (0, 0), (0, K_pad - K)))

    out = pl.pallas_call(
        _fused_conv_relu_pool_fc_kernel,
        out_shape=jax.ShapeDtypeStruct((B, 1, N_pad), jnp.float32),
        grid=(B,),
        in_specs=[
            pl.BlockSpec((1, HW, K_pad), lambda b: (b, 0, 0)),   # one image/step
            pl.BlockSpec((K_pad, Cout), lambda b: (0, 0)),       # grid-invariant
            pl.BlockSpec((Cout, N_pad), lambda b: (0, 0)),       # grid-invariant
            pl.BlockSpec((1, N_pad), lambda b: (0, 0)),          # grid-invariant
        ],
        out_specs=pl.BlockSpec((1, 1, N_pad), lambda b: (b, 0, 0)),
        compiler_params=pltpu.CompilerParams(
            dimension_semantics=("parallel",)),                  # v7x: 2nd TC
    )(patches, prepped["w_conv"], prepped["w_fc"], prepped["b_fc"])

    return out[:, 0, :nclass]


# ----------------------------- Pure-JAX reference ----------------------------
def reference_forward(x_nchw, params):
    x = jnp.transpose(x_nchw, (0, 2, 3, 1))
    w_hwio = jnp.transpose(params["w_conv"], (2, 3, 1, 0))
    y = jax.lax.conv_general_dilated(
        x, w_hwio, window_strides=(1, 1), padding="SAME",
        dimension_numbers=("NHWC", "HWIO", "NHWC"))
    y = jnp.maximum(y, 0.0)
    feat = jnp.mean(y, axis=(1, 2))
    return feat @ params["w_fc"].T + params["b_fc"]


if __name__ == "__main__":
    B, Cin, H, W = 2, 4, 16, 16
    Cout, Nclass = 32, 10

    # Deterministic parameter init (synthetic; no checkpoint loading).
    k1, k2, k3 = jax.random.split(jax.random.PRNGKey(42), 3)
    params = {
        "w_conv": 0.1 * jax.random.normal(k1, (Cout, Cin, 3, 3), jnp.float32),
        "w_fc":   0.1 * jax.random.normal(k2, (Nclass, Cout), jnp.float32),
        "b_fc":   0.01 * jax.random.normal(k3, (Nclass,), jnp.float32),
    }

    # Deterministic example input (PyTorch NCHW convention).
    x = jax.random.normal(jax.random.PRNGKey(0), (B, Cin, H, W), jnp.float32)

    # Weight prep hoisted: done once, not per forward call.
    prepped = jax.tree_util.tree_map(jax.block_until_ready,
                                     prepare_params(params, H, W))

    # Jitted forward (im2col + pallas_call fused into one dispatch).
    fwd = jax.jit(combined_model_forward, static_argnames=("nclass",))
    out = jax.block_until_ready(fwd(x, prepped, nclass=Nclass))

    ref = jax.block_until_ready(reference_forward(x, params))
    np.testing.assert_allclose(np.asarray(out), np.asarray(ref),
                               rtol=1e-4, atol=1e-4)
    print("KERNEL_OK")
</pallas_src>

<mosaic_0001>
module attributes {stable_mosaic.version = 11 : i64} {
  func.func @_fused_conv_relu_pool_fc_kernel(%arg0: i32, %arg1: memref<1x256x128xf32, #tpu.memory_space<vmem>>, %arg2: memref<128x32xf32, #tpu.memory_space<vmem>>, %arg3: memref<32x128xf32, #tpu.memory_space<vmem>>, %arg4: memref<1x128xf32, #tpu.memory_space<vmem>>, %arg5: memref<1x1x128xf32, #tpu.memory_space<vmem>>) attributes {dimension_semantics = [#tpu.dimension_semantics<parallel>], iteration_bounds = array<i64: 2>, scalar_prefetch = 0 : i64, scratch_operands = 0 : i64, tpu.core_type = #tpu.core_type<tc>, window_params = [{transform_indices = @transform_0, window_bounds = array<i64: 1, 256, 128>}, {pipeline_mode = #tpu.pipeline_mode<synchronous>, transform_indices = @transform_1, window_bounds = array<i64: 128, 32>}, {pipeline_mode = #tpu.pipeline_mode<synchronous>, transform_indices = @transform_2, window_bounds = array<i64: 32, 128>}, {pipeline_mode = #tpu.pipeline_mode<synchronous>, transform_indices = @transform_3, window_bounds = array<i64: 1, 128>}, {transform_indices = @transform_4, window_bounds = array<i64: 1, 1, 128>}]} {
    %c0 = arith.constant 0 : index
    %c0_0 = arith.constant 0 : index
    %c0_1 = arith.constant 0 : index
    %0 = vector.load %arg1[%c0, %c0_0, %c0_1] : memref<1x256x128xf32, #tpu.memory_space<vmem>>, vector<1x256x128xf32>
    %1 = vector.shape_cast %0 : vector<1x256x128xf32> to vector<256x128xf32>
    %c0_2 = arith.constant 0 : index
    %c0_3 = arith.constant 0 : index
    %2 = vector.load %arg2[%c0_2, %c0_3] : memref<128x32xf32, #tpu.memory_space<vmem>>, vector<128x32xf32>
    %cst = arith.constant dense<0.000000e+00> : vector<256x32xf32>
    %3 = tpu.matmul %1, %2, %cst {dimension_numbers = #tpu.dot_dimension_numbers<[1], [0], [0], [1], [0, 0, 1, 1], [], []>} : vector<256x128xf32>, vector<128x32xf32>, vector<256x32xf32> -> vector<256x32xf32>
    %cst_4 = arith.constant 0.000000e+00 : f32
    %4 = vector.broadcast %cst_4 : f32 to vector<256x32xf32>
    %5 = arith.maximumf %3, %4 : vector<256x32xf32>
    %cst_5 = arith.constant dense<0.000000e+00> : vector<32xf32>
    %6 = vector.multi_reduction <add>, %5, %cst_5 [0] : vector<256x32xf32> to vector<32xf32>
    %7 = vector.shape_cast %6 : vector<32xf32> to vector<1x32xf32>
    %c0_6 = arith.constant 0 : index
    %c0_7 = arith.constant 0 : index
    %8 = vector.load %arg3[%c0_6, %c0_7] : memref<32x128xf32, #tpu.memory_space<vmem>>, vector<32x128xf32>
    %cst_8 = arith.constant dense<0.000000e+00> : vector<1x128xf32>
    %9 = tpu.matmul %7, %8, %cst_8 {dimension_numbers = #tpu.dot_dimension_numbers<[1], [0], [0], [1], [0, 0, 1, 1], [], []>} : vector<1x32xf32>, vector<32x128xf32>, vector<1x128xf32> -> vector<1x128xf32>
    %c0_9 = arith.constant 0 : index
    %c0_10 = arith.constant 0 : index
    %10 = vector.load %arg4[%c0_9, %c0_10] : memref<1x128xf32, #tpu.memory_space<vmem>>, vector<1x128xf32>
    %11 = arith.addf %9, %10 : vector<1x128xf32>
    %c0_11 = arith.constant 0 : index
    %c0_12 = arith.constant 0 : index
    %c0_13 = arith.constant 0 : index
    %12 = vector.load %arg5[%c0_11, %c0_12, %c0_13] : memref<1x1x128xf32, #tpu.memory_space<vmem>>, vector<1x1x128xf32>
    %13 = vector.shape_cast %12 : vector<1x1x128xf32> to vector<1x128xf32>
    %14 = vector.shape_cast %11 : vector<1x128xf32> to vector<1x1x128xf32>
    tpu.vector_store %arg5[%c0_11, %c0_12, %c0_13], %14 {strides = array<i32>} : memref<1x1x128xf32, #tpu.memory_space<vmem>>, vector<1x1x128xf32>,
    return
  }
  func.func @transform_0(%arg0: i32) -> (i32, i32, i32) {
    %c0_i32 = arith.constant 0 : i32
    %c0_i32_0 = arith.constant 0 : i32
    %c0_i32_1 = arith.constant 0 : i32
    return %arg0, %c0_i32, %c0_i32_0 : i32, i32, i32
  }
  func.func @transform_1(%arg0: i32) -> (i32, i32) {
    %c0_i32 = arith.constant 0 : i32
    %c0_i32_0 = arith.constant 0 : i32
    %c0_i32_1 = arith.constant 0 : i32
    return %c0_i32, %c0_i32_0 : i32, i32
  }
  func.func @transform_2(%arg0: i32) -> (i32, i32) {
    %c0_i32 = arith.constant 0 : i32
    %c0_i32_0 = arith.constant 0 : i32
    %c0_i32_1 = arith.constant 0 : i32
    return %c0_i32, %c0_i32_0 : i32, i32
  }
  func.func @transform_3(%arg0: i32) -> (i32, i32) {
    %c0_i32 = arith.constant 0 : i32
    %c0_i32_0 = arith.constant 0 : i32
    %c0_i32_1 = arith.constant 0 : i32
    return %c0_i32, %c0_i32_0 : i32, i32
  }
  func.func @transform_4(%arg0: i32) -> (i32, i32, i32) {
    %c0_i32 = arith.constant 0 : i32
    %c0_i32_0 = arith.constant 0 : i32
    %c0_i32_1 = arith.constant 0 : i32
    return %arg0, %c0_i32, %c0_i32_0 : i32, i32, i32
  }
}

</mosaic_0001>

<llo_original>
// kernel: combined_model_forward.1
$region0: #{combined_model_forward.1}
  #allocation0 [shape = 'u32[]', space=smem, size = 0x4, offset = 0x4, fixed_abs, tag = 'smem constant byte address 0x4 - core index']
  #allocation1 [shape = 'u32[144,128]{1,0:T(1,128)}', space=vmem, size = 0x12000, scoped, tag = 'internal scratch']
  %s0 = inlined_call_operand.vmem [shape: f32[2,256,128], index: 0, kind: input, shape index: {}]
  %s1 = inlined_call_operand.vmem [shape: f32[128,32], index: 1, kind: input, shape index: {}]
  %s2 = inlined_call_operand.vmem [shape: f32[32,128], index: 2, kind: input, shape index: {}]
  %s3 = inlined_call_operand.vmem [shape: f32[1,128], index: 3, kind: input, shape index: {}]
  %s4 = inlined_call_operand.hbm [shape: f32[2,1,128], index: 4, kind: output, shape index: {}]
  %s5 = sld [smem:[#allocation0]]
  $region49: #{combined_model_forward.1} parent=0
    _
  %s7 = ssub.s32 1, %s5
  %s8 = scalar_select 0, %s7, %s5
  $region1: #{combined_model_forward.1} parent=0
    #allocation2 [shape = 'u8[1024]{0}', space=vmem, size = 0x400, scoped, tag = 'output window, operand 0']
    #allocation3 [shape = 's32[2]{0}', space=sflag, size = 0x8, scoped, tag = 'scoped memory for combined_model_forward.1']
    %9 = vsyncpa [#allocation3], 0
    %s10 = scalar_lea.sflag [#allocation3], 1
    %11 = vsyncpa %s10, 0
    loop: start=0, step=1, limit=4
    $region2: #{combined_model_forward.1} parent=1 // loop_pre_header
      _
    $region3: #{combined_model_forward.1} parent=1 // loop_header
      %s13 = sphi 0, %s17
      %p14 = scmp.ge.s32.totalorder %s13, 4
      %s23 = sphi 0, %s25
      %s26 = sphi 0, %s23
      %s27 = sphi 0, %s26
      %s43 = sphi 0, %s27
      %s47 = sphi 0, %s47
      %s49 = sphi 0, %s47
      %s50 = sphi 0, %s49
      %s64 = sphi 0, %s50
      %s68 = sphi 0, %s68
      %s70 = sphi 0, %s68
      %s71 = sphi 0, %s70
      %s85 = sphi 0, %s71
      %s89 = sphi 0, %s89
      %s91 = sphi 0, %s89
      %s92 = sphi 0, %s91
      %s106 = sphi 0, %s92
      %s112 = sphi 0, %s114
      %s115 = sphi 0, %s112
      %s116 = sphi 0, %s115
      %s132 = sphi 0, %s116
    $region4: #{combined_model_forward.1} parent=1 // loop_header_branch
      %16 = sbr.rel (%p14) target = $region8
    $region5: #{combined_model_forward.1} parent=1 // loop_body
      %s18 = ssub.s32 %s13, 1
      %s19 = ssub.s32 %s13, 2
      %s20 = sadd.s32 %s13, 1
      %s21 = ssub.s32 %s13, %s20
      %p22 = scmp.eq.s32.totalorder %s21, 0
      %s24 = sadd.s32 %s23, 1
      %s25 = scalar_select %p22, %s23, %s24
      %p28 = pneg %p22
      %p29 = scmp.eq.s32.totalorder %s13, 1
      %p30 = por %p28, %p29
      %p31 = scmp.ne.s32.totalorder %s23, %s26
      %p32 = scmp.eq.s32.totalorder %s13, 0
      %p33 = por %p31, %p32
      %p34 = scmp.ne.s32.totalorder %s23, %s26
      %p35 = scmp.eq.s32.totalorder %s18, 1
      %p36 = por %p34, %p35
      %p37 = scmp.ne.s32.totalorder %s26, %s27
      %p38 = scmp.eq.s32.totalorder %s18, 0
      %p39 = por %p37, %p38
      %p40 = scmp.ne.s32.totalorder %s26, %s27
      %p41 = scmp.eq.s32.totalorder %s19, 1
      %p42 = por %p40, %p41
      %p44 = scmp.ne.s32.totalorder %s27, %s43
      %p45 = scmp.eq.s32.totalorder %s19, 0
      %p46 = por %p44, %p45
      %s48 = sadd.s32 %s47, 1
      %p51 = scmp.eq.s32.totalorder %s13, 1
      %p52 = scmp.ne.s32.totalorder %s47, %s49
      %p53 = scmp.eq.s32.totalorder %s13, 0
      %p54 = por %p52, %p53
      %p55 = scmp.ne.s32.totalorder %s47, %s49
      %p56 = scmp.eq.s32.totalorder %s18, 1
      %p57 = por %p55, %p56
      %p58 = scmp.ne.s32.totalorder %s49, %s50
      %p59 = scmp.eq.s32.totalorder %s18, 0
      %p60 = por %p58, %p59
      %p61 = scmp.ne.s32.totalorder %s49, %s50
      %p62 = scmp.eq.s32.totalorder %s19, 1
      %p63 = por %p61, %p62
      %p65 = scmp.ne.s32.totalorder %s50, %s64
      %p66 = scmp.eq.s32.totalorder %s19, 0
      %p67 = por %p65, %p66
      %s69 = sadd.s32 %s68, 1
      %p72 = scmp.eq.s32.totalorder %s13, 1
      %p73 = scmp.ne.s32.totalorder %s68, %s70
      %p74 = scmp.eq.s32.totalorder %s13, 0
      %p75 = por %p73, %p74
      %p76 = scmp.ne.s32.totalorder %s68, %s70
      %p77 = scmp.eq.s32.totalorder %s18, 1
      %p78 = por %p76, %p77
      %p79 = scmp.ne.s32.totalorder %s70, %s71
      %p80 = scmp.eq.s32.totalorder %s18, 0
      %p81 = por %p79, %p80
      %p82 = scmp.ne.s32.totalorder %s70, %s71
      %p83 = scmp.eq.s32.totalorder %s19, 1
      %p84 = por %p82, %p83
      %p86 = scmp.ne.s32.totalorder %s71, %s85
      %p87 = scmp.eq.s32.totalorder %s19, 0
      %p88 = por %p86, %p87
      %s90 = sadd.s32 %s89, 1
      %p93 = scmp.eq.s32.totalorder %s13, 1
      %p94 = scmp.ne.s32.totalorder %s89, %s91
      %p95 = scmp.eq.s32.totalorder %s13, 0
      %p96 = por %p94, %p95
      %p97 = scmp.ne.s32.totalorder %s89, %s91
      %p98 = scmp.eq.s32.totalorder %s18, 1
      %p99 = por %p97, %p98
      %p100 = scmp.ne.s32.totalorder %s91, %s92
      %p101 = scmp.eq.s32.totalorder %s18, 0
      %p102 = por %p100, %p101
      %p103 = scmp.ne.s32.totalorder %s91, %s92
      %p104 = scmp.eq.s32.totalorder %s19, 1
      %p105 = por %p103, %p104
      %p107 = scmp.ne.s32.totalorder %s92, %s106
      %p108 = scmp.eq.s32.totalorder %s19, 0
      %p109 = por %p107, %p108
      %s110 = ssub.s32 %s13, %s20
      %p111 = scmp.eq.s32.totalorder %s110, 0
      %s113 = sadd.s32 %s112, 1
      %s114 = scalar_select %p111, %s112, %s113
      %p117 = pneg %p111
      %p118 = scmp.eq.s32.totalorder %s13, 1
      %p119 = por %p117, %p118
      %p120 = scmp.ne.s32.totalorder %s112, %s115
      %p121 = scmp.eq.s32.totalorder %s13, 0
      %p122 = por %p120, %p121
      %p123 = scmp.ne.s32.totalorder %s112, %s115
      %p124 = scmp.eq.s32.totalorder %s18, 1
      %p125 = por %p123, %p124
      %p126 = scmp.ne.s32.totalorder %s115, %s116
      %p127 = scmp.eq.s32.totalorder %s18, 0
      %p128 = por %p126, %p127
      %p129 = scmp.ne.s32.totalorder %s115, %s116
      %p130 = scmp.eq.s32.totalorder %s19, 1
      %p131 = por %p129, %p130
      %p133 = scmp.ne.s32.totalorder %s116, %s132
      %p134 = scmp.eq.s32.totalorder %s19, 0
      %p135 = por %p133, %p134
      %p136 = scmp.le.s32.totalorder 1, %s13
      %p137 = scmp.lt.s32.totalorder %s13, 3
      %p138 = pnand %p136, %p137
      %p139 = pneg %p138
      // Predicated region
      $region9: #{combined_model_forward.1} parent=5 // pred_check
        _
      $region10: #{combined_model_forward.1} parent=5 // pred_check_branch
        %141 = sbr.rel (%p138) target = $region12
      $region11: #{combined_model_forward.1} parent=5 // pred_region
        %s142 = ssub.s32 %s13, 1
        // Predicated region
        $region13: #{combined_model_forward.1} parent=11 // pred_check
          %p143 = pneg %p60
        $region14: #{combined_model_forward.1} parent=11 // pred_check_branch
          %145 = sbr.rel (%p143) target = $region16
        $region15: #{combined_model_forward.1} parent=11 // pred_region
          _
        $region16: #{combined_model_forward.1} parent=11 // pred_fallthru
          _
        // Predicated region
        $region17: #{combined_model_forward.1} parent=11 // pred_check
          %p146 = pneg %p81
        $region18: #{combined_model_forward.1} parent=11 // pred_check_branch
          %148 = sbr.rel (%p146) target = $region20
        $region19: #{combined_model_forward.1} parent=11 // pred_region
          _
        $region20: #{combined_model_forward.1} parent=11 // pred_fallthru
          _
        // Predicated region
        $region21: #{combined_model_forward.1} parent=11 // pred_check
          %p149 = pneg %p102
        $region22: #{combined_model_forward.1} parent=11 // pred_check_branch
          %151 = sbr.rel (%p149) target = $region24
        $region23: #{combined_model_forward.1} parent=11 // pred_region
          _
        $region24: #{combined_model_forward.1} parent=11 // pred_fallthru
          _
      $region12: #{combined_model_forward.1} parent=5 // pred_fallthru
        _
      %p152 = scmp.lt.s32.totalorder %s13, 2
      // Predicated region
      $region25: #{combined_model_forward.1} parent=5 // pred_check
        %p153 = pneg %p152
      $region26: #{combined_model_forward.1} parent=5 // pred_check_branch
        %155 = sbr.rel (%p153) target = $region28
      $region27: #{combined_model_forward.1} parent=5 // pred_region
        // Predicated region
        $region29: #{combined_model_forward.1} parent=27 // pred_check
          %p156 = pneg %p33
        $region30: #{combined_model_forward.1} parent=27 // pred_check_branch
          %158 = sbr.rel (%p156) target = $region32
        $region31: #{combined_model_forward.1} parent=27 // pred_region
          %p159 = scmp.lt.s32.totalorder %s13, 1
          %s160 = scalar_select %p159, %s13, 1
          %s161 = smul.addr %s160, 32
          %s162 = smul.addr %s161, 8
          %s163 = scalar_lea.vmem %s0, %s162
        $region32: #{combined_model_forward.1} parent=27 // pred_fallthru
          _
      $region28: #{combined_model_forward.1} parent=5 // pred_fallthru
        _
      %p164 = scmp.le.s32.totalorder 1, %s13
      %p165 = scmp.lt.s32.totalorder %s13, 3
      %p166 = pnand %p164, %p165
      %p167 = pneg %p166
      // Predicated region
      $region33: #{combined_model_forward.1} parent=5 // pred_check
        _
      $region34: #{combined_model_forward.1} parent=5 // pred_check_branch
        %169 = sbr.rel (%p166) target = $region36
      $region35: #{combined_model_forward.1} parent=5 // pred_region
        %s170 = ssub.s32 %s13, 1
        %p171 = scmp.lt.s32.totalorder %s18, 1
        %s172 = scalar_select %p171, %s18, 1
        %s173 = smul.addr %s172, 32
        %s174 = smul.addr %s173, 8
        %s175 = scalar_lea.vmem %s0, %s174
        %p176 = pneg %p39
        %p177 = pneg %p36
        %p178 = pneg %p60
        %p179 = pneg %p57
        %p180 = pneg %p81
        %p181 = pneg %p78
        %p182 = pneg %p102
        %p183 = pneg %p99
        %p184 = pneg %p128
        %p185 = pneg %p125
        %s186 = sand.u32 %s115, 1
        %s187 = scalar_lea.sflag [#allocation3], %s186
        %s188 = sand.u32 %s115, 1
        %s189 = scalar_lea.vmem [#allocation2], %s188
        %p190 = scmp.lt.s32.totalorder %s18, 1
        %s191 = scalar_select %p190, %s18, 1
        %s192 = smul.addr %s191, 32
        %s193 = smul.addr %s192, 8
        %s194 = scalar_lea.vmem %s0, %s193
        %v195 = vld [vmem:[%s194] sm:$0xff]
        %v196 = vld [vmem:[%s194 + $0x8] sm:$0xff]
        %v197 = vld [vmem:[%s194 + $0x10] sm:$0xff]
        %v198 = vld [vmem:[%s194 + $0x18] sm:$0xff]
        %v199 = vld [vmem:[%s194 + $0x20] sm:$0xff]
        %v200 = vld [vmem:[%s194 + $0x28] sm:$0xff]
        %v201 = vld [vmem:[%s194 + $0x30] sm:$0xff]
        %v202 = vld [vmem:[%s194 + $0x38] sm:$0xff]
        %v203 = vld [vmem:[%s194 + $0x40] sm:$0xff]
        %v204 = vld [vmem:[%s194 + $0x48] sm:$0xff]
        %v205 = vld [vmem:[%s194 + $0x50] sm:$0xff]
        %v206 = vld [vmem:[%s194 + $0x58] sm:$0xff]
        %v207 = vld [vmem:[%s194 + $0x60] sm:$0xff]
        %v208 = vld [vmem:[%s194 + $0x68] sm:$0xff]
        %v209 = vld [vmem:[%s194 + $0x70] sm:$0xff]
        %v210 = vld [vmem:[%s194 + $0x78] sm:$0xff]
        %v211 = vld [vmem:[%s194 + $0x80] sm:$0xff]
        %v212 = vld [vmem:[%s194 + $0x88] sm:$0xff]
        %v213 = vld [vmem:[%s194 + $0x90] sm:$0xff]
        %v214 = vld [vmem:[%s194 + $0x98] sm:$0xff]
        %v215 = vld [vmem:[%s194 + $0xa0] sm:$0xff]
        %v216 = vld [vmem:[%s194 + $0xa8] sm:$0xff]
        %v217 = vld [vmem:[%s194 + $0xb0] sm:$0xff]
        %v218 = vld [vmem:[%s194 + $0xb8] sm:$0xff]
        %v219 = vld [vmem:[%s194 + $0xc0] sm:$0xff]
        %v220 = vld [vmem:[%s194 + $0xc8] sm:$0xff]
        %v221 = vld [vmem:[%s194 + $0xd0] sm:$0xff]
        %v222 = vld [vmem:[%s194 + $0xd8] sm:$0xff]
        %v223 = vld [vmem:[%s194 + $0xe0] sm:$0xff]
        %v224 = vld [vmem:[%s194 + $0xe8] sm:$0xff]
        %v225 = vld [vmem:[%s194 + $0xf0] sm:$0xff]
        %v226 = vld [vmem:[%s194 + $0xf8] sm:$0xff]
        %v227 = vld [vmem:[%s1] sm:$0xff]
        %v228 = vld [vmem:[%s1 + $0x8] sm:$0xff]
        %v229 = vld [vmem:[%s1 + $0x10] sm:$0xff]
        %v230 = vld [vmem:[%s1 + $0x18] sm:$0xff]
        %v231 = vld [vmem:[%s1 + $0x20] sm:$0xff]
        %v232 = vld [vmem:[%s1 + $0x28] sm:$0xff]
        %v233 = vld [vmem:[%s1 + $0x30] sm:$0xff]
        %v234 = vld [vmem:[%s1 + $0x38] sm:$0xff]
        %v235 = vld [vmem:[%s1 + $0x40] sm:$0xff]
        %v236 = vld [vmem:[%s1 + $0x48] sm:$0xff]
        %v237 = vld [vmem:[%s1 + $0x50] sm:$0xff]
        %v238 = vld [vmem:[%s1 + $0x58] sm:$0xff]
        %v239 = vld [vmem:[%s1 + $0x60] sm:$0xff]
        %v240 = vld [vmem:[%s1 + $0x68] sm:$0xff]
        %v241 = vld [vmem:[%s1 + $0x70] sm:$0xff]
        %v242 = vld [vmem:[%s1 + $0x78] sm:$0xff]
        %243 = vmatprep.subr.mxu0 0.0
        %244 = vmatpush1.msra.mxu0 %v227
        %245 = vmatprep.subr.mxu0 0.0
        %246 = vmatpush1.msra.mxu0 %v228
        %247 = vmatprep.subr.mxu0 0.0
        %248 = vmatpush1.msra.mxu0 %v229
        %249 = vmatprep.subr.mxu0 0.0
        %250 = vmatpush1.msra.mxu0 %v230
        %251 = vmatprep.subr.mxu0 0.0
        %252 = vmatpush1.msra.mxu0 %v231
        %253 = vmatprep.subr.mxu0 0.0
        %254 = vmatpush1.msra.mxu0 %v232
        %255 = vmatprep.subr.mxu0 0.0
        %256 = vmatpush1.msra.mxu0 %v233
        %257 = vmatprep.subr.mxu0 0.0
        %258 = vmatpush1.msra.mxu0 %v234
        %259 = vmatprep.subr.mxu0 0.0
        %260 = vmatpush1.msra.mxu0 %v235
        %261 = vmatprep.subr.mxu0 0.0
        %262 = vmatpush1.msra.mxu0 %v236
        %263 = vmatprep.subr.mxu0 0.0
        %264 = vmatpush1.msra.mxu0 %v237
        %265 = vmatprep.subr.mxu0 0.0
        %266 = vmatpush1.msra.mxu0 %v238
        %267 = vmatprep.subr.mxu0 0.0
        %268 = vmatpush1.msra.mxu0 %v239
        %269 = vmatprep.subr.mxu0 0.0
        %270 = vmatpush1.msra.mxu0 %v240
        %271 = vmatprep.subr.mxu0 0.0
        %272 = vmatpush1.msra.mxu0 %v241
        %273 = vmatprep.subr.mxu0 0.0
        %274 = vmatpush1.msra.mxu0 %v242
        %275 = vmatprep.subr.mxu0 0.0
        %276 = vmatpush1.msra.mxu0 0.0
        %277 = vmatprep.subr.mxu0 0.0
        %278 = vmatpush1.msra.mxu0 0.0
        %279 = vmatprep.subr.mxu0 0.0
        %280 = vmatpush1.msra.mxu0 0.0
        %281 = vmatprep.subr.mxu0 0.0
        %282 = vmatpush1.msra.mxu0 0.0
        %283 = vmatprep.subr.mxu0 0.0
        %284 = vmatpush1.msra.mxu0 0.0
        %285 = vmatprep.subr.mxu0 0.0
        %286 = vmatpush1.msra.mxu0 0.0
        %287 = vmatprep.subr.mxu0 0.0
        %288 = vmatpush1.msra.mxu0 0.0
        %289 = vmatprep.subr.mxu0 0.0
        %290 = vmatpush1.msra.mxu0 0.0
        %291 = vmatprep.subr.mxu0 0.0
        %292 = vmatpush1.msra.mxu0 0.0
        %293 = vmatprep.subr.mxu0 0.0
        %294 = vmatpush1.msra.mxu0 0.0
        %295 = vmatprep.subr.mxu0 0.0
        %296 = vmatpush1.msra.mxu0 0.0
        %297 = vmatprep.subr.mxu0 0.0
        %298 = vmatpush1.msra.mxu0 0.0
        %299 = vmatprep.subr.mxu0 0.0
        %300 = vmatpush1.msra.mxu0 0.0
        %301 = vmatprep.subr.mxu0 0.0
        %302 = vmatpush1.msra.mxu0 0.0
        %303 = vmatprep.subr.mxu0 0.0
        %304 = vmatpush1.msra.mxu0 0.0
        %305 = vmatprep.subr.mxu0 0.0
        %306 = vmatpush1.msra.mxu0 0.0
        %307 = vmatprep.mubr.f32.mxu0 0.0
        %308 = vmatmul.mubr.f32.gmra.mrb[0].mxu0 %v195
        %v309 = vpop.f32.mrb[0].mxu0
        %v310 = vadd.f32 0.0, %v309
        %v311 = vpop.f32.mrb[0].mxu0
        %312 = vmatprep.mubr.f32.mxu0 0.0
        %313 = vmatmul.mubr.f32.gmra.mrb[0].mxu0 %v196
        %v314 = vpop.f32.mrb[0].mxu0
        %v315 = vadd.f32 0.0, %v314
        %v316 = vpop.f32.mrb[0].mxu0
        %317 = vmatprep.mubr.f32.mxu0 0.0
        %318 = vmatmul.mubr.f32.gmra.mrb[0].mxu0 %v197
        %v319 = vpop.f32.mrb[0].mxu0
        %v320 = vadd.f32 0.0, %v319
        %v321 = vpop.f32.mrb[0].mxu0
        %322 = vmatprep.mubr.f32.mxu0 0.0
        %323 = vmatmul.mubr.f32.gmra.mrb[0].mxu0 %v198
        %v324 = vpop.f32.mrb[0].mxu0
        %v325 = vadd.f32 0.0, %v324
        %v326 = vpop.f32.mrb[0].mxu0
        %327 = vmatprep.mubr.f32.mxu0 0.0
        %328 = vmatmul.mubr.f32.gmra.mrb[0].mxu0 %v199
        %v329 = vpop.f32.mrb[0].mxu0
        %v330 = vadd.f32 0.0, %v329
        %v331 = vpop.f32.mrb[0].mxu0
        %332 = vmatprep.mubr.f32.mxu0 0.0
        %333 = vmatmul.mubr.f32.gmra.mrb[0].mxu0 %v200
        %v334 = vpop.f32.mrb[0].mxu0
        %v335 = vadd.f32 0.0, %v334
        %v336 = vpop.f32.mrb[0].mxu0
        %337 = vmatprep.mubr.f32.mxu0 0.0
        %338 = vmatmul.mubr.f32.gmra.mrb[0].mxu0 %v201
        %v339 = vpop.f32.mrb[0].mxu0
        %v340 = vadd.f32 0.0, %v339
        %v341 = vpop.f32.mrb[0].mxu0
        %342 = vmatprep.mubr.f32.mxu0 0.0
        %343 = vmatmul.mubr.f32.gmra.mrb[0].mxu0 %v202
        %v344 = vpop.f32.mrb[0].mxu0
        %v345 = vadd.f32 0.0, %v344
        %v346 = vpop.f32.mrb[0].mxu0
        %347 = vmatprep.mubr.f32.mxu0 0.0
        %348 = vmatmul.mubr.f32.gmra.mrb[0].mxu0 %v203
        %v349 = vpop.f32.mrb[0].mxu0
        %v350 = vadd.f32 0.0, %v349
        %v351 = vpop.f32.mrb[0].mxu0
        %352 = vmatprep.mubr.f32.mxu0 0.0
        %353 = vmatmul.mubr.f32.gmra.mrb[0].mxu0 %v204
        %v354 = vpop.f32.mrb[0].mxu0
        %v355 = vadd.f32 0.0, %v354
        %v356 = vpop.f32.mrb[0].mxu0
        %357 = vmatprep.mubr.f32.mxu0 0.0
        %358 = vmatmul.mubr.f32.gmra.mrb[0].mxu0 %v205
        %v359 = vpop.f32.mrb[0].mxu0
        %v360 = vadd.f32 0.0, %v359
        %v361 = vpop.f32.mrb[0].mxu0
        %362 = vmatprep.mubr.f32.mxu0 0.0
        %363 = vmatmul.mubr.f32.gmra.mrb[0].mxu0 %v206
        %v364 = vpop.f32.mrb[0].mxu0
        %v365 = vadd.f32 0.0, %v364
        %v366 = vpop.f32.mrb[0].mxu0
        %367 = vmatprep.mubr.f32.mxu0 0.0
        %368 = vmatmul.mubr.f32.gmra.mrb[0].mxu0 %v207
        %v369 = vpop.f32.mrb[0].mxu0
        %v370 = vadd.f32 0.0, %v369
        %v371 = vpop.f32.mrb[0].mxu0
        %372 = vmatprep.mubr.f32.mxu0 0.0
        %373 = vmatmul.mubr.f32.gmra.mrb[0].mxu0 %v208
        %v374 = vpop.f32.mrb[0].mxu0
        %v375 = vadd.f32 0.0, %v374
        %v376 = vpop.f32.mrb[0].mxu0
        %377 = vmatprep.mubr.f32.mxu0 0.0
        %378 = vmatmul.mubr.f32.gmra.mrb[0].mxu0 %v209
        %v379 = vpop.f32.mrb[0].mxu0
        %v380 = vadd.f32 0.0, %v379
        %v381 = vpop.f32.mrb[0].mxu0
        %382 = vmatprep.mubr.f32.mxu0 0.0
        %383 = vmatmul.mubr.f32.gmra.mrb[0].mxu0 %v210
        %v384 = vpop.f32.mrb[0].mxu0
        %v385 = vadd.f32 0.0, %v384
        %v386 = vpop.f32.mrb[0].mxu0
        %387 = vmatprep.mubr.f32.mxu0 0.0
        %388 = vmatmul.mubr.f32.gmra.mrb[0].mxu0 %v211
        %v389 = vpop.f32.mrb[0].mxu0
        %v390 = vadd.f32 0.0, %v389
        %v391 = vpop.f32.mrb[0].mxu0
        %392 = vmatprep.mubr.f32.mxu0 0.0
        %393 = vmatmul.mubr.f32.gmra.mrb[0].mxu0 %v212
        %v394 = vpop.f32.mrb[0].mxu0
        %v395 = vadd.f32 0.0, %v394
        %v396 = vpop.f32.mrb[0].mxu0
        %397 = vmatprep.mubr.f32.mxu0 0.0
        %398 = vmatmul.mubr.f32.gmra.mrb[0].mxu0 %v213
        %v399 = vpop.f32.mrb[0].mxu0
        %v400 = vadd.f32 0.0, %v399
        %v401 = vpop.f32.mrb[0].mxu0
        %402 = vmatprep.mubr.f32.mxu0 0.0
        %403 = vmatmul.mubr.f32.gmra.mrb[0].mxu0 %v214
        %v404 = vpop.f32.mrb[0].mxu0
        %v405 = vadd.f32 0.0, %v404
        %v406 = vpop.f32.mrb[0].mxu0
        %407 = vmatprep.mubr.f32.mxu0 0.0
        %408 = vmatmul.mubr.f32.gmra.mrb[0].mxu0 %v215
        %v409 = vpop.f32.mrb[0].mxu0
        %v410 = vadd.f32 0.0, %v409
        %v411 = vpop.f32.mrb[0].mxu0
        %412 = vmatprep.mubr.f32.mxu0 0.0
        %413 = vmatmul.mubr.f32.gmra.mrb[0].mxu0 %v216
        %v414 = vpop.f32.mrb[0].mxu0
        %v415 = vadd.f32 0.0, %v414
        %v416 = vpop.f32.mrb[0].mxu0
        %417 = vmatprep.mubr.f32.mxu0 0.0
        %418 = vmatmul.mubr.f32.gmra.mrb[0].mxu0 %v217
        %v419 = vpop.f32.mrb[0].mxu0
        %v420 = vadd.f32 0.0, %v419
        %v421 = vpop.f32.mrb[0].mxu0
        %422 = vmatprep.mubr.f32.mxu0 0.0
        %423 = vmatmul.mubr.f32.gmra.mrb[0].mxu0 %v218
        %v424 = vpop.f32.mrb[0].mxu0
        %v425 = vadd.f32 0.0, %v424
        %v426 = vpop.f32.mrb[0].mxu0
        %427 = vmatprep.mubr.f32.mxu0 0.0
        %428 = vmatmul.mubr.f32.gmra.mrb[0].mxu0 %v219
        %v429 = vpop.f32.mrb[0].mxu0
        %v430 = vadd.f32 0.0, %v429
        %v431 = vpop.f32.mrb[0].mxu0
        %432 = vmatprep.mubr.f32.mxu0 0.0
        %433 = vmatmul.mubr.f32.gmra.mrb[0].mxu0 %v220
        %v434 = vpop.f32.mrb[0].mxu0
        %v435 = vadd.f32 0.0, %v434
        %v436 = vpop.f32.mrb[0].mxu0
        %437 = vmatprep.mubr.f32.mxu0 0.0
        %438 = vmatmul.mubr.f32.gmra.mrb[0].mxu0 %v221
        %v439 = vpop.f32.mrb[0].mxu0
        %v440 = vadd.f32 0.0, %v439
        %v441 = vpop.f32.mrb[0].mxu0
        %442 = vmatprep.mubr.f32.mxu0 0.0
        %443 = vmatmul.mubr.f32.gmra.mrb[0].mxu0 %v222
        %v444 = vpop.f32.mrb[0].mxu0
        %v445 = vadd.f32 0.0, %v444
        %v446 = vpop.f32.mrb[0].mxu0
        %447 = vmatprep.mubr.f32.mxu0 0.0
        %448 = vmatmul.mubr.f32.gmra.mrb[0].mxu0 %v223
        %v449 = vpop.f32.mrb[0].mxu0
        %v450 = vadd.f32 0.0, %v449
        %v451 = vpop.f32.mrb[0].mxu0
        %452 = vmatprep.mubr.f32.mxu0 0.0
        %453 = vmatmul.mubr.f32.gmra.mrb[0].mxu0 %v224
        %v454 = vpop.f32.mrb[0].mxu0
        %v455 = vadd.f32 0.0, %v454
        %v456 = vpop.f32.mrb[0].mxu0
        %457 = vmatprep.mubr.f32.mxu0 0.0
        %458 = vmatmul.mubr.f32.gmra.mrb[0].mxu0 %v225
        %v459 = vpop.f32.mrb[0].mxu0
        %v460 = vadd.f32 0.0, %v459
        %v461 = vpop.f32.mrb[0].mxu0
        %462 = vmatprep.mubr.f32.mxu0 0.0
        %463 = vmatmul.mubr.f32.gmra.mrb[0].mxu0 %v226
        %v464 = vpop.f32.mrb[0].mxu0
        %v465 = vadd.f32 0.0, %v464
        %v466 = vpop.f32.mrb[0].mxu0
        %467 = vdwg.mxu0
        %v468 = vmax.f32 %v310, 0.0
        %v469 = vmax.f32 %v315, 0.0
        %v470 = vmax.f32 %v320, 0.0
        %v471 = vmax.f32 %v325, 0.0
        %v472 = vmax.f32 %v330, 0.0
        %v473 = vmax.f32 %v335, 0.0
        %v474 = vmax.f32 %v340, 0.0
        %v475 = vmax.f32 %v345, 0.0
        %v476 = vmax.f32 %v350, 0.0
        %v477 = vmax.f32 %v355, 0.0
        %v478 = vmax.f32 %v360, 0.0
        %v479 = vmax.f32 %v365, 0.0
        %v480 = vmax.f32 %v370, 0.0
        %v481 = vmax.f32 %v375, 0.0
        %v482 = vmax.f32 %v380, 0.0
        %v483 = vmax.f32 %v385, 0.0
        %v484 = vmax.f32 %v390, 0.0
        %v485 = vmax.f32 %v395, 0.0
        %v486 = vmax.f32 %v400, 0.0
        %v487 = vmax.f32 %v405, 0.0
        %v488 = vmax.f32 %v410, 0.0
        %v489 = vmax.f32 %v415, 0.0
        %v490 = vmax.f32 %v420, 0.0
        %v491 = vmax.f32 %v425, 0.0
        %v492 = vmax.f32 %v430, 0.0
        %v493 = vmax.f32 %v435, 0.0
        %v494 = vmax.f32 %v440, 0.0
        %v495 = vmax.f32 %v445, 0.0
        %v496 = vmax.f32 %v450, 0.0
        %v497 = vmax.f32 %v455, 0.0
        %v498 = vmax.f32 %v460, 0.0
        %v499 = vmax.f32 %v465, 0.0
        %vm500 = vcmask 261120
        %v501 = vsel %vm500, %v468, 0.0
        %v502 = vsel %vm500, %v469, 0.0
        %v503 = vadd.f32 %v501, %v502
        %v504 = vsel %vm500, %v470, 0.0
        %v505 = vadd.f32 %v503, %v504
        %v506 = vsel %vm500, %v471, 0.0
        %v507 = vadd.f32 %v505, %v506
        %v508 = vsel %vm500, %v472, 0.0
        %v509 = vadd.f32 %v507, %v508
        %v510 = vsel %vm500, %v473, 0.0
        %v511 = vadd.f32 %v509, %v510
        %v512 = vsel %vm500, %v474, 0.0
        %v513 = vadd.f32 %v511, %v512
        %v514 = vsel %vm500, %v475, 0.0
        %v515 = vadd.f32 %v513, %v514
        %v516 = vsel %vm500, %v476, 0.0
        %v517 = vadd.f32 %v515, %v516
        %v518 = vsel %vm500, %v477, 0.0
        %v519 = vadd.f32 %v517, %v518
        %v520 = vsel %vm500, %v478, 0.0
        %v521 = vadd.f32 %v519, %v520
        %v522 = vsel %vm500, %v479, 0.0
        %v523 = vadd.f32 %v521, %v522
        %v524 = vsel %vm500, %v480, 0.0
        %v525 = vadd.f32 %v523, %v524
        %v526 = vsel %vm500, %v481, 0.0
        %v527 = vadd.f32 %v525, %v526
        %v528 = vsel %vm500, %v482, 0.0
        %v529 = vadd.f32 %v527, %v528
        %v530 = vsel %vm500, %v483, 0.0
        %v531 = vadd.f32 %v529, %v530
        %v532 = vsel %vm500, %v484, 0.0
        %v533 = vadd.f32 %v531, %v532
        %v534 = vsel %vm500, %v485, 0.0
        %v535 = vadd.f32 %v533, %v534
        %v536 = vsel %vm500, %v486, 0.0
        %v537 = vadd.f32 %v535, %v536
        %v538 = vsel %vm500, %v487, 0.0
        %v539 = vadd.f32 %v537, %v538
        %v540 = vsel %vm500, %v488, 0.0
        %v541 = vadd.f32 %v539, %v540
        %v542 = vsel %vm500, %v489, 0.0
        %v543 = vadd.f32 %v541, %v542
        %v544 = vsel %vm500, %v490, 0.0
        %v545 = vadd.f32 %v543, %v544
        %v546 = vsel %vm500, %v491, 0.0
        %v547 = vadd.f32 %v545, %v546
        %v548 = vsel %vm500, %v492, 0.0
        %v549 = vadd.f32 %v547, %v548
        %v550 = vsel %vm500, %v493, 0.0
        %v551 = vadd.f32 %v549, %v550
        %v552 = vsel %vm500, %v494, 0.0
        %v553 = vadd.f32 %v551, %v552
        %v554 = vsel %vm500, %v495, 0.0
        %v555 = vadd.f32 %v553, %v554
        %v556 = vsel %vm500, %v496, 0.0
        %v557 = vadd.f32 %v555, %v556
        %v558 = vsel %vm500, %v497, 0.0
        %v559 = vadd.f32 %v557, %v558
        %v560 = vsel %vm500, %v498, 0.0
        %v561 = vadd.f32 %v559, %v560
        %v562 = vsel %vm500, %v499, 0.0
        %v563 = vadd.f32 %v561, %v562
        %v564 = vrot.slane %v563, 4
        %v565 = vadd.f32 %v563, %v564
        %v566 = vrot.slane %v565, 2
        %v567 = vadd.f32 %v565, %v566
        %v568 = vrot.slane %v567, 1
        %v569 = vadd.f32 %v567, %v568
        %v570 = vld [vmem:[%s2] sm:$0xff]
        %v571 = vld [vmem:[%s2 + $0x8] sm:$0xff]
        %v572 = vld [vmem:[%s2 + $0x10] sm:$0xff]
        %v573 = vld [vmem:[%s2 + $0x18] sm:$0xff]
        %v574 = vld [vmem:[%s3] sm:$0x1]
        %v576 = vsel %vm500, %v569, 0
        %578 = vmatprep.subr.mxu0 0.0
        %579 = vmatpush1.msra.mxu0 %v570
        %580 = vmatprep.subr.mxu0 0.0
        %581 = vmatpush1.msra.mxu0 %v571
        %582 = vmatprep.subr.mxu0 0.0
        %583 = vmatpush1.msra.mxu0 %v572
        %584 = vmatprep.subr.mxu0 0.0
        %585 = vmatpush1.msra.mxu0 %v573
        %586 = vmatprep.subr.mxu0 0.0
        %587 = vmatpush1.msra.mxu0 0.0
        %588 = vmatprep.subr.mxu0 0.0
        %589 = vmatpush1.msra.mxu0 0.0
        %590 = vmatprep.subr.mxu0 0.0
        %591 = vmatpush1.msra.mxu0 0.0
        %592 = vmatprep.subr.mxu0 0.0
        %593 = vmatpush1.msra.mxu0 0.0
        %594 = vmatprep.subr.mxu0 0.0
        %595 = vmatpush1.msra.mxu0 0.0
        %596 = vmatprep.subr.mxu0 0.0
        %597 = vmatpush1.msra.mxu0 0.0
        %598 = vmatprep.subr.mxu0 0.0
        %599 = vmatpush1.msra.mxu0 0.0
        %600 = vmatprep.subr.mxu0 0.0
        %601 = vmatpush1.msra.mxu0 0.0
        %602 = vmatprep.subr.mxu0 0.0
        %603 = vmatpush1.msra.mxu0 0.0
        %604 = vmatprep.subr.mxu0 0.0
        %605 = vmatpush1.msra.mxu0 0.0
        %606 = vmatprep.subr.mxu0 0.0
        %607 = vmatpush1.msra.mxu0 0.0
        %608 = vmatprep.subr.mxu0 0.0
        %609 = vmatpush1.msra.mxu0 0.0
        %610 = vmatprep.subr.mxu0 0.0
        %611 = vmatpush1.msra.mxu0 0.0
        %612 = vmatprep.subr.mxu0 0.0
        %613 = vmatpush1.msra.mxu0 0.0
        %614 = vmatprep.subr.mxu0 0.0
        %615 = vmatpush1.msra.mxu0 0.0
        %616 = vmatprep.subr.mxu0 0.0
        %617 = vmatpush1.msra.mxu0 0.0
        %618 = vmatprep.subr.mxu0 0.0
        %619 = vmatpush1.msra.mxu0 0.0
        %620 = vmatprep.subr.mxu0 0.0
        %621 = vmatpush1.msra.mxu0 0.0
        %622 = vmatprep.subr.mxu0 0.0
        %623 = vmatpush1.msra.mxu0 0.0
        %624 = vmatprep.subr.mxu0 0.0
        %625 = vmatpush1.msra.mxu0 0.0
        %626 = vmatprep.subr.mxu0 0.0
        %627 = vmatpush1.msra.mxu0 0.0
        %628 = vmatprep.subr.mxu0 0.0
        %629 = vmatpush1.msra.mxu0 0.0
        %630 = vmatprep.subr.mxu0 0.0
        %631 = vmatpush1.msra.mxu0 0.0
        %632 = vmatprep.subr.mxu0 0.0
        %633 = vmatpush1.msra.mxu0 0.0
        %634 = vmatprep.subr.mxu0 0.0
        %635 = vmatpush1.msra.mxu0 0.0
        %636 = vmatprep.subr.mxu0 0.0
        %637 = vmatpush1.msra.mxu0 0.0
        %638 = vmatprep.subr.mxu0 0.0
        %639 = vmatpush1.msra.mxu0 0.0
        %640 = vmatprep.subr.mxu0 0.0
        %641 = vmatpush1.msra.mxu0 0.0
        %642 = vmatprep.mubr.f32.mxu0 0.0
        %643 = vmatmul.mubr.f32.gmra.mrb[0].mxu0 %v576
        %v644 = vpop.f32.mrb[0].mxu0
        %v645 = vadd.f32 %v574, %v644
        %v646 = vpop.f32.mrb[0].mxu0
        %647 = vdwg.mxu0
        %648 = vst [vmem:[%s189] sm:$0x1] %v645
        %s649 = sand.u32 %s115, 1
        %s650 = scalar_lea.sflag [#allocation3], %s649
        %s651 = sand.u32 %s115, 1
        %s652 = scalar_lea.vmem [#allocation2], %s651
        // Predicated region
        $region37: #{combined_model_forward.1} parent=35 // pred_check
          %p653 = pneg %p125
        $region38: #{combined_model_forward.1} parent=35 // pred_check_branch
          %655 = sbr.rel (%p653) target = $region40
        $region39: #{combined_model_forward.1} parent=35 // pred_region
          %s657 = ssub.s32 16, 16
          %658 = vsyncadd %s650, %s657
          %s659 = smul.addr %s18, 16
          %s660 = scalar_lea.hbm %s4, %s659
          %s662 = sshll.u32 %s652, 4
          %s663 = int_to_ptr.vmem [resolvable:$true] %s662
          %665 = dma.vmem_to_hbm [thread:$0]  %s663, 16, %s660, %s650
        $region40: #{combined_model_forward.1} parent=35 // pred_fallthru
          _
      $region36: #{combined_model_forward.1} parent=5 // pred_fallthru
        _
      %p666 = scmp.le.s32.totalorder 2, %s13
      // Predicated region
      $region41: #{combined_model_forward.1} parent=5 // pred_check
        %p667 = pneg %p666
      $region42: #{combined_model_forward.1} parent=5 // pred_check_branch
        %669 = sbr.rel (%p667) target = $region44
      $region43: #{combined_model_forward.1} parent=5 // pred_region
        %s670 = ssub.s32 %s13, 2
        // Predicated region
        $region45: #{combined_model_forward.1} parent=43 // pred_check
          %p671 = pneg %p131
        $region46: #{combined_model_forward.1} parent=43 // pred_check_branch
          %673 = sbr.rel (%p671) target = $region48
        $region47: #{combined_model_forward.1} parent=43 // pred_region
          %s674 = sand.u32 %s116, 1
          %s675 = scalar_lea.sflag [#allocation3], %s674
          %s676 = sand.u32 %s116, 1
          %s677 = scalar_lea.vmem [#allocation2], %s676
          %678 = dma.done %s675, 16
        $region48: #{combined_model_forward.1} parent=43 // pred_fallthru
          _
      $region44: #{combined_model_forward.1} parent=5 // pred_fallthru
        _
    $region6: #{combined_model_forward.1} parent=1 // loop_footer
      %s17 = sadd.s32 1, %s13
    $region7: #{combined_model_forward.1} parent=1 // loop_footer_branch
      %12 = sbr.rel target = $region3
    $region8: #{combined_model_forward.1} parent=1 // loop_exit
      _
    %679 = vsyncpa [#allocation3], 1
    %s680 = scalar_lea.sflag [#allocation3], 1
    %681 = vsyncpa %s680, 1

</llo_original>
